<compile_context>
chip_gen: v7x
topology: tpu7x:2x2x1
jax: 0.10.0
libtpu: 0.0.40
codegen_flags: <defaults>
</compile_context>

<pallas_src>
import functools

import jax
import jax.numpy as jnp
from jax.experimental import pallas as pl
from jax.experimental.pallas import tpu as pltpu

DEFAULT_ALIF_ADAPTIVE_ALPHA_MEAN = 3.0
DEFAULT_ALIF_ADAPTIVE_ALPHA_STD = 0.1
DEFAULT_ALIF_ADAPTIVE_RHO_MEAN = 4.0
DEFAULT_ALIF_ADAPTIVE_RHO_STD = 0.5
DEFAULT_ALIF_ALPHA = 0.9
DEFAULT_ALIF_BETA = 0.8
DEFAULT_ALIF_RHO = 0.9
DEFAULT_ALIF_THETA = 0.1


def _vmem_limit_bytes() -> int:
    """Scoped-VMEM budget derived from the device (v7x: 64 MiB physical,
    v5e/v6e: 128 MiB).  Leaves headroom for compiler-internal scratch."""
    cap = None
    try:
        cap = pltpu.get_tpu_info().vmem_capacity_bytes
    except Exception:
        cap = None
    if not cap:
        cap = 64 * 1024 * 1024          # conservative fallback (v7x-safe)
    return int(min(cap * 3 // 4, 100 * 1024 * 1024))


def _pick_tile(dim: int, unit: int, max_tile: int) -> int:
    """Largest multiple of `unit` that divides `dim` and is <= max_tile.
    Falls back to the full dimension (a full-extent block is always legal).
    # TODO(synk): for non-divisible / very large dims, pad in the wrapper
    # (cdiv grid + masked tail) instead of taking a full-extent block."""
    if dim <= max_tile:
        return dim
    t = (max_tile // unit) * unit
    while t >= unit:
        if dim % t == 0:
            return t
        t -= unit
    return dim


def _pick_t_block(T: int, B: int, max_rows: int = 512, max_t: int = 32) -> int:
    """Largest divisor of T with T_blk <= max_t and T_blk*B <= max_rows.
    Keeps the fused matmul block MXU-row-sized while bounding the vreg live
    range of the unrolled in-kernel recurrence."""
    cap = max(1, min(max_t, max_rows // max(B, 1), T))
    for cand in range(cap, 0, -1):
        if T % cand == 0:
            return cand
    return 1


def _alif_update(in_sum, u, a, alpha, rho, beta, theta):
    """Shared ALIF elementwise update (used by kernels and references).

    Algebraically identical to the torch module:
        u = u*alpha + in_sum*(1-alpha) == in_sum + alpha*(u - in_sum)
        a = a*rho   + z*(1-rho)        == z      + rho  *(a - z)"""
    theta_t = theta + a * beta
    u = in_sum + alpha * (u - in_sum)
    utheta = u - theta_t
    z = (utheta > 0.0).astype(u.dtype)   # forward value of StepGaussianGrad
    u = u - z * theta_t
    a = z + rho * (a - z)
    return z, u, a


# ----------------------------------------------------------------------------
# Single-timestep fused kernel (module-equivalent forward)
# ----------------------------------------------------------------------------
def _alif_step_kernel(x_ref, wt_ref, alpha_ref, rho_ref, u_ref, a_ref,
                      z_out, u_out, a_out, *, beta, theta):
    # MXU: in_sum = x @ W^T   (W passed pre-transposed as (In, L) block)
    in_sum = jnp.dot(x_ref[...], wt_ref[...],
                     preferred_element_type=jnp.float32)
    b, tl = u_ref.shape
    alpha = jnp.broadcast_to(alpha_ref[...], (b, tl))
    rho = jnp.broadcast_to(rho_ref[...], (b, tl))
    z, u, a = _alif_update(in_sum, u_ref[...], a_ref[...],
                           alpha, rho, beta, theta)
    z_out[...] = z.astype(z_out.dtype)
    u_out[...] = u
    a_out[...] = a


def alif_cell_forward(x, state, wt, alpha_param, rho_param,
                      beta=DEFAULT_ALIF_BETA, theta=DEFAULT_ALIF_THETA,
                      adaptive_alpha=True, adaptive_rho=True,
                      matmul_dtype=jnp.bfloat16):
    """One ALIFCell step.

    x: (B, In) f32; state = (z, u, a), each (B, L) f32.
    wt: (In, L) f32 (transposed torch Linear weight, bias=False).
    alpha_param, rho_param: (L,) pre-sigmoid parameters (if adaptive).
    matmul_dtype: dtype of the MXU operands (bf16 halves HBM traffic; all
                  elementwise state math stays in f32)."""
    _, u, a = state                      # previous z is not used by forward
    B, In = x.shape
    L = u.shape[-1]

    # Hoist sigmoid out of the kernel (computed once, passed post-sigmoid).
    alpha_s = jax.nn.sigmoid(alpha_param) if adaptive_alpha else alpha_param
    rho_s = jax.nn.sigmoid(rho_param) if adaptive_rho else rho_param
    alpha_s = alpha_s.reshape(1, L).astype(jnp.float32)
    rho_s = rho_s.reshape(1, L).astype(jnp.float32)

    x_c = x.astype(matmul_dtype)
    wt_c = wt.astype(matmul_dtype)
    u = u.astype(jnp.float32)
    a = a.astype(jnp.float32)

    tb = _pick_tile(B, 8, 256)           # sublane tile
    tl = _pick_tile(L, 128, 512)         # lane tile (multiple of 128)
    grid = (B // tb, L // tl)

    # TODO(synk): add a K (In) grid axis + f32 VMEM accumulator if In grows
    # large enough that the full-K (tb, In)+(In, tl) pair pressures VMEM.
    itemsize = jnp.dtype(matmul_dtype).itemsize
    cost = pl.CostEstimate(
        flops=2 * B * In * L + 7 * B * L,
        transcendentals=0,
        bytes_accessed=((B * In + In * L) * itemsize
                        + (2 * L + 2 * B * L) * 4      # alpha/rho/u/a reads
                        + 3 * B * L * 4))              # z/u/a writes

    kernel = functools.partial(_alif_step_kernel,
                               beta=float(beta), theta=float(theta))
    out_sd = jax.ShapeDtypeStruct((B, L), jnp.float32)

    # NOTE: input_output_aliases on u/a was dropped on purpose — without jit
    # donation the caller-side reuse of `state` forces a defensive copy anyway.
    # TODO(synk): re-enable {4: 1, 5: 2} aliasing for jitted callers that
    # donate the state and do not reuse it.
    return pl.pallas_call(
        kernel,
        out_shape=(out_sd, out_sd, out_sd),
        grid=grid,
        in_specs=[
            pl.BlockSpec((tb, In), lambda i, j: (i, 0)),   # x
            pl.BlockSpec((In, tl), lambda i, j: (0, j)),   # W^T
            pl.BlockSpec((1, tl), lambda i, j: (0, j)),    # sigmoid(alpha)
            pl.BlockSpec((1, tl), lambda i, j: (0, j)),    # sigmoid(rho)
            pl.BlockSpec((tb, tl), lambda i, j: (i, j)),   # u
            pl.BlockSpec((tb, tl), lambda i, j: (i, j)),   # a
        ],
        out_specs=(
            pl.BlockSpec((tb, tl), lambda i, j: (i, j)),   # z
            pl.BlockSpec((tb, tl), lambda i, j: (i, j)),   # u
            pl.BlockSpec((tb, tl), lambda i, j: (i, j)),   # a
        ),
        cost_estimate=cost,
        compiler_params=pltpu.CompilerParams(
            dimension_semantics=("parallel", "parallel"),
            vmem_limit_bytes=_vmem_limit_bytes()),
    )(x_c, wt_c, alpha_s, rho_s, u, a)


# ----------------------------------------------------------------------------
# Sequence path: single fused kernel (projection + T-blocked recurrence)
# ----------------------------------------------------------------------------
def _alif_fused_seq_kernel(x_ref, wt_ref, alpha_ref, rho_ref, u0_ref, a0_ref,
                           z_out, u_out, a_out, u_s, a_s,
                           *, beta, theta, t_blk, b):
    t = pl.program_id(1)

    @pl.when(t == 0)
    def _():
        # New L-tile: (re)load the initial state into the resident scratch.
        u_s[...] = u0_ref[...]
        a_s[...] = a0_ref[...]

    # MXU: input projection for all t_blk timesteps of this block at once.
    # W^T's block index is constant across the T axis -> resident in VMEM.
    in_sum = jnp.dot(x_ref[...], wt_ref[...],
                     preferred_element_type=jnp.float32)

    tl = u_s.shape[-1]
    # Hoist the (1, tl) -> (b, tl) broadcasts out of the unrolled loop.
    alpha = jnp.broadcast_to(alpha_ref[...], (b, tl))
    rho = jnp.broadcast_to(rho_ref[...], (b, tl))

    u = u_s[...]
    a = a_s[...]
    # Statically unrolled in-block recurrence (static slices are free; t_blk is
    # kept small by _pick_t_block so vreg live ranges stay bounded).
    for s in range(t_blk):
        z, u, a = _alif_update(in_sum[s * b:(s + 1) * b, :], u, a,
                               alpha, rho, beta, theta)
        z_out[pl.ds(s * b, b), :] = z.astype(z_out.dtype)
    u_s[...] = u
    a_s[...] = a

    @pl.when(t == pl.num_programs(1) - 1)
    def _():
        u_out[...] = u
        a_out[...] = a


def alif_sequence_forward(x_seq, state, wt, alpha_param, rho_param,
                          beta=DEFAULT_ALIF_BETA, theta=DEFAULT_ALIF_THETA,
                          adaptive_alpha=True, adaptive_rho=True,
                          matmul_dtype=jnp.bfloat16, z_dtype=jnp.bfloat16):
    """Run the ALIFCell over a whole sequence x_seq: (T, B, In).

    Returns (z_seq (T, B, L) in z_dtype, u_T (B, L) f32, a_T (B, L) f32).
    z is exactly 0.0/1.0 so z_dtype=bf16 is lossless and halves the dominant
    HBM write stream."""
    _, u0, a0 = state
    T, B, In = x_seq.shape
    L = u0.shape[-1]

    alpha_s = jax.nn.sigmoid(alpha_param) if adaptive_alpha else alpha_param
    rho_s = jax.nn.sigmoid(rho_param) if adaptive_rho else rho_param
    alpha_s = alpha_s.reshape(1, L).astype(jnp.float32)
    rho_s = rho_s.reshape(1, L).astype(jnp.float32)

    x2d = x_seq.reshape(T * B, In).astype(matmul_dtype)   # free wrapper reshape
    wt_c = wt.astype(matmul_dtype)
    u0 = u0.astype(jnp.float32)
    a0 = a0.astype(jnp.float32)

    # L tile: lane-dense; cap at L//2 when L >= 256 so the "parallel" grid axis
    # exposes >= 2 slices for v7x's second TensorCore.
    tl_cap = 1024
    if L >= 256:
        tl_cap = min(tl_cap, L // 2)
    tl = _pick_tile(L, 128, tl_cap)

    # T block: amortize per-grid-step overhead and fill MXU rows.
    t_blk = _pick_t_block(T, B)
    rows = t_blk * B
    grid = (L // tl, T // t_blk)

    # TODO(synk): add a K (In) grid axis + VMEM f32 accumulator for very
    # large In (keeps the x / W^T blocks MXU-shaped regardless of In).
    kernel = functools.partial(_alif_fused_seq_kernel,
                               beta=float(beta), theta=float(theta),
                               t_blk=t_blk, b=B)

    mb = jnp.dtype(matmul_dtype).itemsize
    zb = jnp.dtype(z_dtype).itemsize
    cost = pl.CostEstimate(
        flops=2 * T * B * In * L + 7 * T * B * L,
        transcendentals=0,
        bytes_accessed=(T * B * In * mb + In * L * mb
                        + (2 * L + 2 * B * L) * 4          # alpha/rho/u0/a0
                        + T * B * L * zb + 2 * B * L * 4))  # z_seq/u_T/a_T

    z2d, u_T, a_T = pl.pallas_call(
        kernel,
        out_shape=(jax.ShapeDtypeStruct((T * B, L), z_dtype),
                   jax.ShapeDtypeStruct((B, L), jnp.float32),
                   jax.ShapeDtypeStruct((B, L), jnp.float32)),
        grid=grid,
        in_specs=[
            pl.BlockSpec((rows, In), lambda l, t: (t, 0)),   # x rows (bf16)
            pl.BlockSpec((In, tl), lambda l, t: (0, l)),     # W^T (resident)
            pl.BlockSpec((1, tl), lambda l, t: (0, l)),      # sigmoid(alpha)
            pl.BlockSpec((1, tl), lambda l, t: (0, l)),      # sigmoid(rho)
            pl.BlockSpec((B, tl), lambda l, t: (0, l)),      # u0
            pl.BlockSpec((B, tl), lambda l, t: (0, l)),      # a0
        ],
        out_specs=(
            pl.BlockSpec((rows, tl), lambda l, t: (t, l)),   # z rows
            pl.BlockSpec((B, tl), lambda l, t: (0, l)),      # u_T
            pl.BlockSpec((B, tl), lambda l, t: (0, l)),      # a_T
        ),
        scratch_shapes=[pltpu.VMEM((B, tl), jnp.float32),
                        pltpu.VMEM((B, tl), jnp.float32)],
        cost_estimate=cost,
        compiler_params=pltpu.CompilerParams(
            dimension_semantics=("parallel", "arbitrary"),
            vmem_limit_bytes=_vmem_limit_bytes()),
    )(x2d, wt_c, alpha_s, rho_s, u0, a0)
    return z2d.reshape(T, B, L), u_T, a_T


# ----------------------------------------------------------------------------
# Pure-JAX references
# ----------------------------------------------------------------------------
def alif_cell_reference(x, state, wt, alpha_param, rho_param,
                        beta=DEFAULT_ALIF_BETA, theta=DEFAULT_ALIF_THETA,
                        matmul_dtype=jnp.bfloat16):
    _, u, a = state
    in_sum = jnp.dot(x.astype(matmul_dtype), wt.astype(matmul_dtype),
                     preferred_element_type=jnp.float32)
    alpha = jax.nn.sigmoid(alpha_param)[None, :]
    rho = jax.nn.sigmoid(rho_param)[None, :]
    return _alif_update(in_sum, u, a, alpha, rho, beta, theta)


def alif_sequence_reference(x_seq, state, wt, alpha_param, rho_param,
                            beta=DEFAULT_ALIF_BETA, theta=DEFAULT_ALIF_THETA,
                            matmul_dtype=jnp.bfloat16):
    _, u0, a0 = state
    T, B, In = x_seq.shape
    L = u0.shape[-1]
    in_sum = jnp.dot(x_seq.reshape(T * B, In).astype(matmul_dtype),
                     wt.astype(matmul_dtype),
                     preferred_element_type=jnp.float32).reshape(T, B, L)
    alpha = jax.nn.sigmoid(alpha_param)[None, :]
    rho = jax.nn.sigmoid(rho_param)[None, :]

    def step(carry, s):
        u, a = carry
        z, u, a = _alif_update(s, u, a, alpha, rho, beta, theta)
        return (u, a), z

    (u_T, a_T), z_seq = jax.lax.scan(step, (u0, a0), in_sum)
    return z_seq, u_T, a_T


if __name__ == "__main__":
    batch = 8
    input_size = 64
    layer_size = 128
    seq_len = 16

    key = jax.random.PRNGKey(0)
    k_w, k_al, k_rh, k_x, k_u, k_a, k_xs = jax.random.split(key, 7)

    # deterministic parameter init mirroring ALIFCell.__init__:
    #  - linear.weight: xavier_uniform, shape (layer_size, input_size), no bias
    bound = (6.0 / (input_size + layer_size)) ** 0.5
    w = jax.random.uniform(k_w, (layer_size, input_size), jnp.float32,
                           minval=-bound, maxval=bound)
    wt = w.T                                     # (In, L) for the kernels

    #  - alpha ~ N(3.0, 0.1), rho ~ N(4.0, 0.5)  (adaptive, pre-sigmoid)
    alpha_param = (DEFAULT_ALIF_ADAPTIVE_ALPHA_MEAN
                   + DEFAULT_ALIF_ADAPTIVE_ALPHA_STD
                   * jax.random.normal(k_al, (layer_size,), jnp.float32))
    rho_param = (DEFAULT_ALIF_ADAPTIVE_RHO_MEAN
                 + DEFAULT_ALIF_ADAPTIVE_RHO_STD
                 * jax.random.normal(k_rh, (layer_size,), jnp.float32))

    # inputs / state
    x = jax.random.normal(k_x, (batch, input_size), jnp.float32)
    z0 = jnp.zeros((batch, layer_size), jnp.float32)
    u0 = 0.1 * jax.random.normal(k_u, (batch, layer_size), jnp.float32)
    a0 = 0.05 * jax.random.normal(k_a, (batch, layer_size), jnp.float32)
    state = (z0, u0, a0)

    def frac_close(p, q, atol=1e-3):
        p = p.astype(jnp.float32)
        q = q.astype(jnp.float32)
        return float(jnp.mean((jnp.abs(p - q) <= atol).astype(jnp.float32)))

    # ---- single-step cell (module-equivalent forward) ----
    z, u, a = alif_cell_forward(x, state, wt, alpha_param, rho_param)
    jax.block_until_ready((z, u, a))
    z_r, u_r, a_r = alif_cell_reference(x, state, wt, alpha_param, rho_param)
    # A hard spike threshold can flip on last-bit matmul rounding differences
    # between the in-kernel MXU dot and the XLA reference dot, so allow a tiny
    # mismatch fraction instead of requiring bitwise equality.
    assert frac_close(z, z_r) >= 0.999, "z mismatch (step)"
    assert frac_close(u, u_r) >= 0.999, "u mismatch (step)"
    assert frac_close(a, a_r) >= 0.999, "a mismatch (step)"

    # ---- sequence path (fused projection + T-blocked recurrence) ----
    x_seq = jax.random.normal(k_xs, (seq_len, batch, input_size), jnp.float32)
    z_seq, u_T, a_T = alif_sequence_forward(x_seq, state, wt,
                                            alpha_param, rho_param)
    jax.block_until_ready((z_seq, u_T, a_T))
    z_seq_r, u_T_r, a_T_r = alif_sequence_reference(x_seq, state, wt,
                                                    alpha_param, rho_param)
    assert frac_close(z_seq, z_seq_r) >= 0.995, "z_seq mismatch (sequence)"
    assert frac_close(u_T, u_T_r) >= 0.995, "u_T mismatch (sequence)"
    assert frac_close(a_T, a_T_r) >= 0.995, "a_T mismatch (sequence)"

    print("KERNEL_OK")
</pallas_src>

<mosaic_0001>
module attributes {stable_mosaic.version = 11 : i64} {
  func.func @_alif_step_kernel(%arg0: i32, %arg1: i32, %arg2: memref<8x64xbf16, #tpu.memory_space<vmem>>, %arg3: memref<64x128xbf16, #tpu.memory_space<vmem>>, %arg4: memref<1x128xf32, #tpu.memory_space<vmem>>, %arg5: memref<1x128xf32, #tpu.memory_space<vmem>>, %arg6: memref<8x128xf32, #tpu.memory_space<vmem>>, %arg7: memref<8x128xf32, #tpu.memory_space<vmem>>, %arg8: memref<8x128xf32, #tpu.memory_space<vmem>>, %arg9: memref<8x128xf32, #tpu.memory_space<vmem>>, %arg10: memref<8x128xf32, #tpu.memory_space<vmem>>) attributes {dimension_semantics = [#tpu.dimension_semantics<parallel>, #tpu.dimension_semantics<parallel>], iteration_bounds = array<i64: 1, 1>, scalar_prefetch = 0 : i64, scratch_operands = 0 : i64, tpu.core_type = #tpu.core_type<tc>, window_params = [{transform_indices = @transform_0, window_bounds = array<i64: 8, 64>}, {transform_indices = @transform_1, window_bounds = array<i64: 64, 128>}, {transform_indices = @transform_2, window_bounds = array<i64: 1, 128>}, {transform_indices = @transform_3, window_bounds = array<i64: 1, 128>}, {transform_indices = @transform_4, window_bounds = array<i64: 8, 128>}, {transform_indices = @transform_5, window_bounds = array<i64: 8, 128>}, {transform_indices = @transform_6, window_bounds = array<i64: 8, 128>}, {transform_indices = @transform_7, window_bounds = array<i64: 8, 128>}, {transform_indices = @transform_8, window_bounds = array<i64: 8, 128>}]} {
    %c0 = arith.constant 0 : index
    %c0_0 = arith.constant 0 : index
    %0 = vector.load %arg2[%c0, %c0_0] : memref<8x64xbf16, #tpu.memory_space<vmem>>, vector<8x64xbf16>
    %c0_1 = arith.constant 0 : index
    %c0_2 = arith.constant 0 : index
    %1 = vector.load %arg3[%c0_1, %c0_2] : memref<64x128xbf16, #tpu.memory_space<vmem>>, vector<64x128xbf16>
    %cst = arith.constant dense<0.000000e+00> : vector<8x128xf32>
    %2 = tpu.matmul %0, %1, %cst {dimension_numbers = #tpu.dot_dimension_numbers<[1], [0], [0], [1], [0, 0, 1, 1], [], []>} : vector<8x64xbf16>, vector<64x128xbf16>, vector<8x128xf32> -> vector<8x128xf32>
    %c0_3 = arith.constant 0 : index
    %c0_4 = arith.constant 0 : index
    %3 = vector.load %arg4[%c0_3, %c0_4] : memref<1x128xf32, #tpu.memory_space<vmem>>, vector<1x128xf32>
    %4 = vector.shape_cast %3 : vector<1x128xf32> to vector<1x128xf32>
    %5 = vector.broadcast %4 : vector<1x128xf32> to vector<8x128xf32>
    %c0_5 = arith.constant 0 : index
    %c0_6 = arith.constant 0 : index
    %6 = vector.load %arg5[%c0_5, %c0_6] : memref<1x128xf32, #tpu.memory_space<vmem>>, vector<1x128xf32>
    %7 = vector.shape_cast %6 : vector<1x128xf32> to vector<1x128xf32>
    %8 = vector.broadcast %7 : vector<1x128xf32> to vector<8x128xf32>
    %c0_7 = arith.constant 0 : index
    %c0_8 = arith.constant 0 : index
    %9 = vector.load %arg6[%c0_7, %c0_8] : memref<8x128xf32, #tpu.memory_space<vmem>>, vector<8x128xf32>
    %c0_9 = arith.constant 0 : index
    %c0_10 = arith.constant 0 : index
    %10 = vector.load %arg7[%c0_9, %c0_10] : memref<8x128xf32, #tpu.memory_space<vmem>>, vector<8x128xf32>
    %cst_11 = arith.constant 8.000000e-01 : f32
    %11 = vector.broadcast %cst_11 : f32 to vector<8x128xf32>
    %12 = arith.mulf %10, %11 : vector<8x128xf32>
    %cst_12 = arith.constant 1.000000e-01 : f32
    %13 = vector.broadcast %cst_12 : f32 to vector<8x128xf32>
    %14 = arith.addf %13, %12 : vector<8x128xf32>
    %15 = arith.subf %9, %2 : vector<8x128xf32>
    %16 = arith.mulf %5, %15 : vector<8x128xf32>
    %17 = arith.addf %2, %16 : vector<8x128xf32>
    %18 = arith.subf %17, %14 : vector<8x128xf32>
    %cst_13 = arith.constant 0.000000e+00 : f32
    %19 = vector.broadcast %cst_13 : f32 to vector<8x128xf32>
    %20 = arith.cmpf ogt, %18, %19 : vector<8x128xf32>
    %21 = arith.extui %20 : vector<8x128xi1> to vector<8x128xi32>
    %22 = arith.sitofp %21 : vector<8x128xi32> to vector<8x128xf32>
    %23 = arith.mulf %22, %14 : vector<8x128xf32>
    %24 = arith.subf %17, %23 : vector<8x128xf32>
    %25 = arith.subf %10, %22 : vector<8x128xf32>
    %26 = arith.mulf %8, %25 : vector<8x128xf32>
    %27 = arith.addf %22, %26 : vector<8x128xf32>
    %c0_14 = arith.constant 0 : index
    %c0_15 = arith.constant 0 : index
    %28 = vector.load %arg8[%c0_14, %c0_15] : memref<8x128xf32, #tpu.memory_space<vmem>>, vector<8x128xf32>
    tpu.vector_store %arg8[%c0_14, %c0_15], %22 {strides = array<i32>} : memref<8x128xf32, #tpu.memory_space<vmem>>, vector<8x128xf32>,
    %c0_16 = arith.constant 0 : index
    %c0_17 = arith.constant 0 : index
    %29 = vector.load %arg9[%c0_16, %c0_17] : memref<8x128xf32, #tpu.memory_space<vmem>>, vector<8x128xf32>
    tpu.vector_store %arg9[%c0_16, %c0_17], %24 {strides = array<i32>} : memref<8x128xf32, #tpu.memory_space<vmem>>, vector<8x128xf32>,
    %c0_18 = arith.constant 0 : index
    %c0_19 = arith.constant 0 : index
    %30 = vector.load %arg10[%c0_18, %c0_19] : memref<8x128xf32, #tpu.memory_space<vmem>>, vector<8x128xf32>
    tpu.vector_store %arg10[%c0_18, %c0_19], %27 {strides = array<i32>} : memref<8x128xf32, #tpu.memory_space<vmem>>, vector<8x128xf32>,
    return
  }
  func.func @transform_0(%arg0: i32, %arg1: i32) -> (i32, i32) {
    %c0_i32 = arith.constant 0 : i32
    %c0_i32_0 = arith.constant 0 : i32
    return %arg0, %c0_i32 : i32, i32
  }
  func.func @transform_1(%arg0: i32, %arg1: i32) -> (i32, i32) {
    %c0_i32 = arith.constant 0 : i32
    %c0_i32_0 = arith.constant 0 : i32
    return %c0_i32, %arg1 : i32, i32
  }
  func.func @transform_2(%arg0: i32, %arg1: i32) -> (i32, i32) {
    %c0_i32 = arith.constant 0 : i32
    %c0_i32_0 = arith.constant 0 : i32
    return %c0_i32, %arg1 : i32, i32
  }
  func.func @transform_3(%arg0: i32, %arg1: i32) -> (i32, i32) {
    %c0_i32 = arith.constant 0 : i32
    %c0_i32_0 = arith.constant 0 : i32
    return %c0_i32, %arg1 : i32, i32
  }
  func.func @transform_4(%arg0: i32, %arg1: i32) -> (i32, i32) {
    %c0_i32 = arith.constant 0 : i32
    return %arg0, %arg1 : i32, i32
  }
  func.func @transform_5(%arg0: i32, %arg1: i32) -> (i32, i32) {
    %c0_i32 = arith.constant 0 : i32
    return %arg0, %arg1 : i32, i32
  }
  func.func @transform_6(%arg0: i32, %arg1: i32) -> (i32, i32) {
    %c0_i32 = arith.constant 0 : i32
    return %arg0, %arg1 : i32, i32
  }
  func.func @transform_7(%arg0: i32, %arg1: i32) -> (i32, i32) {
    %c0_i32 = arith.constant 0 : i32
    return %arg0, %arg1 : i32, i32
  }
  func.func @transform_8(%arg0: i32, %arg1: i32) -> (i32, i32) {
    %c0_i32 = arith.constant 0 : i32
    return %arg0, %arg1 : i32, i32
  }
}

</mosaic_0001>

<llo_original>
// kernel: tpu_custom_call.1
$region0: #{tpu_custom_call.1}
  #allocation0 [shape = 'u32[]', space=smem, size = 0x4, offset = 0x4, fixed_abs, tag = 'smem constant byte address 0x4 - core index']
  #allocation1 [shape = 'u32[144,128]{1,0:T(1,128)}', space=vmem, size = 0x12000, scoped, tag = 'internal scratch']
  %s0 = inlined_call_operand.hbm [shape: bf16[8,64], index: 0, kind: input, shape index: {}]
  %s1 = inlined_call_operand.hbm [shape: bf16[64,128], index: 1, kind: input, shape index: {}]
  %s2 = inlined_call_operand.vmem [shape: f32[1,128], index: 2, kind: input, shape index: {}]
  %s3 = inlined_call_operand.vmem [shape: f32[1,128], index: 3, kind: input, shape index: {}]
  %s4 = inlined_call_operand.vmem [shape: f32[8,128], index: 4, kind: input, shape index: {}]
  %s5 = inlined_call_operand.vmem [shape: f32[8,128], index: 5, kind: input, shape index: {}]
  %s6 = inlined_call_operand.hbm [shape: f32[8,128], index: 6, kind: output, shape index: {0}]
  %s7 = inlined_call_operand.hbm [shape: f32[8,128], index: 7, kind: output, shape index: {1}]
  %s8 = inlined_call_operand.hbm [shape: f32[8,128], index: 8, kind: output, shape index: {2}]
  %9 = xla_tuple %s6, %s7, %s8
  %s10 = sld [smem:[#allocation0]]
  $region58: #{tpu_custom_call.1} parent=0
    _
  %s12 = ssub.s32 1, %s10
  %s13 = scalar_select 0, %s12, %s10
  $region1: #{tpu_custom_call.1} parent=0
    #allocation2 [shape = 'u8[2048]{0}', space=vmem, size = 0x800, scoped, tag = 'input window, operand 0, single buffered']
    #allocation3 [shape = 's32[1]{0}', space=sflag, size = 0x4, scoped, tag = 'scoped memory for tpu_custom_call.1']
    #allocation4 [shape = 's32[1]{0}', space=sflag, size = 0x4, scoped, tag = 'scoped memory for tpu_custom_call.1']
    #allocation5 [shape = 'u8[16384]{0}', space=vmem, size = 0x4000, scoped, tag = 'input window, operand 1, single buffered']
    #allocation6 [shape = 's32[1]{0}', space=sflag, size = 0x4, scoped, tag = 'scoped memory for tpu_custom_call.1']
    #allocation7 [shape = 'u8[4096]{0}', space=vmem, size = 0x1000, scoped, tag = 'output window, operand 0, single buffered']
    #allocation8 [shape = 'u8[4096]{0}', space=vmem, size = 0x1000, scoped, tag = 'output window, operand 1, single buffered']
    #allocation9 [shape = 's32[1]{0}', space=sflag, size = 0x4, scoped, tag = 'scoped memory for tpu_custom_call.1']
    #allocation10 [shape = 'u8[4096]{0}', space=vmem, size = 0x1000, scoped, tag = 'output window, operand 2, single buffered']
    %14 = vsyncpa [#allocation3], 0
    %15 = vsyncpa [#allocation6], 0
    %16 = vsyncpa [#allocation4], 0
    %17 = vsyncpa [#allocation9], 0
    // Predicated region
    $region2: #{tpu_custom_call.1} parent=1 // pred_check
      _
    $region3: #{tpu_custom_call.1} parent=1 // pred_check_branch
      %19 = sbr.rel (0) target = $region5
    $region4: #{tpu_custom_call.1} parent=1 // pred_region
      %s21 = ssub.s32 64, 64
      %22 = vsyncadd [#allocation3], %s21
      %s24 = sshll.u32 [#allocation2], 4
      %s25 = int_to_ptr.vmem [resolvable:$true] %s24
      %27 = dma.hbm_to_vmem [thread:$0]  %s0, 64, %s25, [#allocation3]
    $region5: #{tpu_custom_call.1} parent=1 // pred_fallthru
      _
    // Predicated region
    $region6: #{tpu_custom_call.1} parent=1 // pred_check
      _
    $region7: #{tpu_custom_call.1} parent=1 // pred_check_branch
      %29 = sbr.rel (0) target = $region9
    $region8: #{tpu_custom_call.1} parent=1 // pred_region
      %s31 = ssub.s32 512, 512
      %32 = vsyncadd [#allocation6], %s31
      %s33 = sshll.u32 [#allocation5], 4
      %s34 = int_to_ptr.vmem [resolvable:$true] %s33
      %39 = dma.hbm_to_vmem [thread:$0]  %s1, 512, %s34, [#allocation6], 64, 64, 4
    $region9: #{tpu_custom_call.1} parent=1 // pred_fallthru
      _
    // Predicated region
    $region10: #{tpu_custom_call.1} parent=1 // pred_check
      _
    $region11: #{tpu_custom_call.1} parent=1 // pred_check_branch
      %41 = sbr.rel (0) target = $region13
    $region12: #{tpu_custom_call.1} parent=1 // pred_region
      _
    $region13: #{tpu_custom_call.1} parent=1 // pred_fallthru
      _
    // Predicated region
    $region14: #{tpu_custom_call.1} parent=1 // pred_check
      _
    $region15: #{tpu_custom_call.1} parent=1 // pred_check_branch
      %43 = sbr.rel (0) target = $region17
    $region16: #{tpu_custom_call.1} parent=1 // pred_region
      _
    $region17: #{tpu_custom_call.1} parent=1 // pred_fallthru
      _
    // Predicated region
    $region18: #{tpu_custom_call.1} parent=1 // pred_check
      _
    $region19: #{tpu_custom_call.1} parent=1 // pred_check_branch
      %45 = sbr.rel (0) target = $region21
    $region20: #{tpu_custom_call.1} parent=1 // pred_region
      _
    $region21: #{tpu_custom_call.1} parent=1 // pred_fallthru
      _
    // Predicated region
    $region22: #{tpu_custom_call.1} parent=1 // pred_check
      _
    $region23: #{tpu_custom_call.1} parent=1 // pred_check_branch
      %47 = sbr.rel (0) target = $region25
    $region24: #{tpu_custom_call.1} parent=1 // pred_region
      _
    $region25: #{tpu_custom_call.1} parent=1 // pred_fallthru
      _
    // Predicated region
    $region26: #{tpu_custom_call.1} parent=1 // pred_check
      _
    $region27: #{tpu_custom_call.1} parent=1 // pred_check_branch
      %49 = sbr.rel (0) target = $region29
    $region28: #{tpu_custom_call.1} parent=1 // pred_region
      %50 = dma.done [#allocation3], 64
    $region29: #{tpu_custom_call.1} parent=1 // pred_fallthru
      _
    // Predicated region
    $region30: #{tpu_custom_call.1} parent=1 // pred_check
      _
    $region31: #{tpu_custom_call.1} parent=1 // pred_check_branch
      %52 = sbr.rel (0) target = $region33
    $region32: #{tpu_custom_call.1} parent=1 // pred_region
      %53 = dma.done [#allocation6], 512
    $region33: #{tpu_custom_call.1} parent=1 // pred_fallthru
      _
    %v55 = vld [vmem:[#allocation2] sm:$0xf]
    %v56 = vld [vmem:[#allocation5] sm:$0xf]
    %v57 = vld [vmem:[#allocation5 + $0x4] sm:$0xf]
    %v58 = vld [vmem:[#allocation5 + $0x8] sm:$0xf]
    %v59 = vld [vmem:[#allocation5 + $0xc] sm:$0xf]
    %v60 = vld [vmem:[#allocation5 + $0x10] sm:$0xf]
    %v61 = vld [vmem:[#allocation5 + $0x14] sm:$0xf]
    %v62 = vld [vmem:[#allocation5 + $0x18] sm:$0xf]
    %v63 = vld [vmem:[#allocation5 + $0x1c] sm:$0xf]
    %v72 = vunpack.c.l.b16 %v56
    %v73 = vunpack.c.l.b16 %v57
    %v74 = vunpack.c.l.b16 %v58
    %v75 = vunpack.c.l.b16 %v59
    %v76 = vunpack.c.l.b16 %v60
    %v77 = vunpack.c.l.b16 %v61
    %v78 = vunpack.c.l.b16 %v62
    %v79 = vunpack.c.l.b16 %v63
    %v80 = vpack.c.b16 %v73, %v72
    %v81 = vpack.c.b16 %v75, %v74
    %v82 = vpack.c.b16 %v77, %v76
    %v83 = vpack.c.b16 %v79, %v78
    %vm88 = vcmask 523264
    %v90 = vsel %vm88, %v55, 0
    %92 = vmatprep.subr.bf16.mxu0 0
    %93 = vmatpush1.bf16.msra.mxu0 %v80
    %94 = vmatprep.subr.bf16.mxu0 0
    %95 = vmatpush1.bf16.msra.mxu0 %v81
    %96 = vmatprep.subr.bf16.mxu0 0
    %97 = vmatpush1.bf16.msra.mxu0 %v82
    %98 = vmatprep.subr.bf16.mxu0 0
    %99 = vmatpush1.bf16.msra.mxu0 %v83
    %100 = vmatprep.subr.bf16.mxu0 0
    %101 = vmatpush1.bf16.msra.mxu0 0
    %102 = vmatprep.subr.bf16.mxu0 0
    %103 = vmatpush1.bf16.msra.mxu0 0
    %104 = vmatprep.subr.bf16.mxu0 0
    %105 = vmatpush1.bf16.msra.mxu0 0
    %106 = vmatprep.subr.bf16.mxu0 0
    %107 = vmatpush1.bf16.msra.mxu0 0
    %108 = vmatprep.subr.bf16.mxu0 0
    %109 = vmatpush1.bf16.msra.mxu0 0
    %110 = vmatprep.subr.bf16.mxu0 0
    %111 = vmatpush1.bf16.msra.mxu0 0
    %112 = vmatprep.subr.bf16.mxu0 0
    %113 = vmatpush1.bf16.msra.mxu0 0
    %114 = vmatprep.subr.bf16.mxu0 0
    %115 = vmatpush1.bf16.msra.mxu0 0
    %116 = vmatprep.subr.bf16.mxu0 0
    %117 = vmatpush1.bf16.msra.mxu0 0
    %118 = vmatprep.subr.bf16.mxu0 0
    %119 = vmatpush1.bf16.msra.mxu0 0
    %120 = vmatprep.subr.bf16.mxu0 0
    %121 = vmatpush1.bf16.msra.mxu0 0
    %122 = vmatprep.subr.bf16.mxu0 0
    %123 = vmatpush1.bf16.msra.mxu0 0
    %124 = vmatprep.mubr.bf16.mxu0 0
    %125 = vmatmul.mubr.bf16.gmra.mrb[0].mxu0 %v90
    %v126 = vpop.f32.mrb[0].mxu0
    %v127 = vadd.f32 0.0, %v126
    %v128 = vpop.f32.mrb[0].mxu0
    %v129 = vpop.f32.mrb[0].mxu0
    %v130 = vpop.f32.mrb[0].mxu0
    %131 = vdwg.mxu0
    %v132 = vld [vmem:[%s2] sm:$0x1]
    %v134 = vlaneseq
    %v135 = vshrl.u32 %v134, 7
    %v136 = vsub.s32 0, %v135
    %v137 = vrot.slane %v132, %v136
    %v139 = vld [vmem:[%s3] sm:$0x1]
    %v141 = vlaneseq
    %v142 = vshrl.u32 %v141, 7
    %v143 = vsub.s32 0, %v142
    %v144 = vrot.slane %v139, %v143
    %v146 = vld [vmem:[%s4] sm:$0xff]
    %v147 = vld [vmem:[%s5] sm:$0xff]
    %v148 = vmul.f32 %v147, 0.8
    %v149 = vadd.f32 %v148, 0.1
    %v150 = vsub.f32 %v146, %v127
    %v151 = vmul.f32 %v137, %v150
    %v152 = vadd.f32 %v127, %v151
    %v153 = vsub.f32 %v152, %v149
    %vm154 = vcmp.gt.f32.partialorder %v153, 0.0
    %v155 = vsel %vm154, 1, 0
    %v156 = vcvt.s32.f32 %v155
    %v157 = vmul.f32 %v156, %v149
    %v158 = vsub.f32 %v152, %v157
    %v159 = vsub.f32 %v147, %v156
    %v160 = vmul.f32 %v144, %v159
    %v161 = vadd.f32 %v156, %v160
    %162 = vst [vmem:[#allocation7] sm:$0xff] %v156
    %163 = vst [vmem:[#allocation8] sm:$0xff] %v158
    %164 = vst [vmem:[#allocation10] sm:$0xff] %v161
    // Predicated region
    $region34: #{tpu_custom_call.1} parent=1 // pred_check
      _
    $region35: #{tpu_custom_call.1} parent=1 // pred_check_branch
      %166 = sbr.rel (0) target = $region37
    $region36: #{tpu_custom_call.1} parent=1 // pred_region
      %s168 = ssub.s32 128, 128
      %169 = vsyncadd [#allocation4], %s168
      %s171 = sshll.u32 [#allocation7], 4
      %s172 = int_to_ptr.vmem [resolvable:$true] %s171
      %174 = dma.vmem_to_hbm [thread:$0]  %s172, 128, %s6, [#allocation4]
    $region37: #{tpu_custom_call.1} parent=1 // pred_fallthru
      _
    // Predicated region
    $region38: #{tpu_custom_call.1} parent=1 // pred_check
      _
    $region39: #{tpu_custom_call.1} parent=1 // pred_check_branch
      %176 = sbr.rel (0) target = $region41
    $region40: #{tpu_custom_call.1} parent=1 // pred_region
      %s178 = ssub.s32 128, 128
      %179 = vsyncadd [#allocation9], %s178
      %s181 = sshll.u32 [#allocation8], 4
      %s182 = int_to_ptr.vmem [resolvable:$true] %s181
      %184 = dma.vmem_to_hbm [thread:$0]  %s182, 128, %s7, [#allocation9]
    $region41: #{tpu_custom_call.1} parent=1 // pred_fallthru
      _
    // Predicated region
    $region42: #{tpu_custom_call.1} parent=1 // pred_check
      _
    $region43: #{tpu_custom_call.1} parent=1 // pred_check_branch
      %186 = sbr.rel (0) target = $region45
    $region44: #{tpu_custom_call.1} parent=1 // pred_region
      %s188 = ssub.s32 128, 128
      %189 = vsyncadd [#allocation9], %s188
      %s191 = sshll.u32 [#allocation10], 4
      %s192 = int_to_ptr.vmem [resolvable:$true] %s191
      %194 = dma.vmem_to_hbm [thread:$0]  %s192, 128, %s8, [#allocation9]
    $region45: #{tpu_custom_call.1} parent=1 // pred_fallthru
      _
    // Predicated region
    $region46: #{tpu_custom_call.1} parent=1 // pred_check
      _
    $region47: #{tpu_custom_call.1} parent=1 // pred_check_branch
      %196 = sbr.rel (0) target = $region49
    $region48: #{tpu_custom_call.1} parent=1 // pred_region
      %197 = dma.done [#allocation4], 128
    $region49: #{tpu_custom_call.1} parent=1 // pred_fallthru
      _
    // Predicated region
    $region50: #{tpu_custom_call.1} parent=1 // pred_check
      _
    $region51: #{tpu_custom_call.1} parent=1 // pred_check_branch
      %199 = sbr.rel (0) target = $region53
    $region52: #{tpu_custom_call.1} parent=1 // pred_region
      %200 = dma.done [#allocation9], 128
    $region53: #{tpu_custom_call.1} parent=1 // pred_fallthru
      _
    // Predicated region
    $region54: #{tpu_custom_call.1} parent=1 // pred_check
      _
    $region55: #{tpu_custom_call.1} parent=1 // pred_check_branch
      %202 = sbr.rel (0) target = $region57
    $region56: #{tpu_custom_call.1} parent=1 // pred_region
      %203 = dma.done [#allocation9], 128
    $region57: #{tpu_custom_call.1} parent=1 // pred_fallthru
      _
    %204 = vsyncpa [#allocation3], 1
    %205 = vsyncpa [#allocation6], 1
    %206 = vsyncpa [#allocation4], 1
    %207 = vsyncpa [#allocation9], 1

</llo_original>
